<compile_context>
chip_gen: v7x
topology: tpu7x:2x2x1
jax: 0.10.0
libtpu: 0.0.40
codegen_flags: <defaults>
</compile_context>

<pallas_src>
import jax
import jax.numpy as jnp
from jax import lax
from jax.experimental import pallas as pl
from jax.experimental.pallas import tpu as pltpu

EPS = 1e-5
_VMEM_LIMIT = 64 * 1024 * 1024   # safe on v5e/v6e (128 MiB) and v7x (64 MiB)


def _pick_hw_tile(hw, max_lanes=2048):
    """Largest multiple of 128 that divides HW (capped), else the full HW."""
    for t in (max_lanes, 1024, 512, 256, 128):
        if t <= hw and hw % t == 0:
            return t
    return hw   # HW not a multiple of 128: single full block along lanes


def _stats_kernel(x_ref, noise_ref, sum_ref, sumsq_ref):
    # x_ref: (1, Cin, Thw)   noise_ref: (Cin, Thw)
    # sum_ref / sumsq_ref: (Cin, 1) accumulators, resident across the grid.
    @pl.when((pl.program_id(0) == 0) & (pl.program_id(1) == 0))
    def _init():
        sum_ref[...] = jnp.zeros_like(sum_ref)
        sumsq_ref[...] = jnp.zeros_like(sumsq_ref)

    z = jnp.maximum(x_ref[0] + noise_ref[...], 0.0)          # (Cin, Thw)
    sum_ref[...] += jnp.sum(z, axis=1, keepdims=True)
    sumsq_ref[...] += jnp.sum(z * z, axis=1, keepdims=True)


def _apply_kernel(x_ref, noise_ref, w_ref, b_ref, out_ref):
    # relu(x + noise) followed by the BN-folded 1x1 conv: out = W' @ z + b'
    # x_ref: (1, Cin, Thw)  noise_ref: (Cin, Thw)
    # w_ref: (Cout, Cin)    b_ref: (Cout, 1)   out_ref: (1, Cout, Thw)
    z = jnp.maximum(x_ref[0] + noise_ref[...], 0.0)          # (Cin, Thw)
    w = w_ref[...]                                           # (Cout, Cin)
    cout, cin = w.shape
    if cin <= 32:
        # Tiny contraction: unrolled VPU multiply-adds, HW stays on lanes.
        acc = w[:, 0:1] * z[0:1, :]
        for ci in range(1, cin):
            acc = acc + w[:, ci:ci + 1] * z[ci:ci + 1, :]
    else:
        acc = jnp.dot(w, z, preferred_element_type=jnp.float32)
    out_ref[0] = acc + b_ref[...]                            # (Cout, Thw)


def noise_layer_forward(x_nchw, noise_chw, gamma, beta, conv_w_oihw, conv_b):
    """x_nchw: (N, Cin, H, W) float32 -> (N, Cout, H, W) float32."""
    n, cin, h, w = x_nchw.shape
    cout = conv_w_oihw.shape[0]
    hw = h * w
    thw = _pick_hw_tile(hw)
    num_t = hw // thw
    grid = (n, num_t)

    # Channel-on-sublanes / HW-on-lanes layout: pure reshapes, no transposes.
    x = x_nchw.reshape(n, cin, hw)
    noise = noise_chw.reshape(cin, hw)
    wmat = conv_w_oihw.reshape(cout, cin)

    # ---- pass 1: per-channel sum / sum-of-squares of relu(x + noise) ----
    ssum, ssq = pl.pallas_call(
        _stats_kernel,
        out_shape=(jax.ShapeDtypeStruct((cin, 1), jnp.float32),
                   jax.ShapeDtypeStruct((cin, 1), jnp.float32)),
        grid=grid,
        in_specs=[
            pl.BlockSpec((1, cin, thw), lambda i, t: (i, 0, t)),
            pl.BlockSpec((cin, thw), lambda i, t: (0, t)),
        ],
        out_specs=(pl.BlockSpec((cin, 1), lambda i, t: (0, 0)),
                   pl.BlockSpec((cin, 1), lambda i, t: (0, 0))),
        compiler_params=pltpu.CompilerParams(
            dimension_semantics=("arbitrary", "arbitrary"),
            vmem_limit_bytes=_VMEM_LIMIT),
    )(x, noise)

    # ---- fold BatchNorm into the 1x1 conv (tiny O(Cin*Cout) XLA op) ----
    count = jnp.float32(n * hw)
    mean = ssum / count                                      # (Cin, 1)
    var = jnp.maximum(ssq / count - mean * mean, 0.0)        # biased variance
    scale = gamma.reshape(cin, 1) * lax.rsqrt(var + EPS)     # (Cin, 1)
    shift = beta.reshape(cin, 1) - mean * scale              # (Cin, 1)
    w_fold = wmat * scale.reshape(1, cin)                    # (Cout, Cin)
    b_fold = wmat @ shift + conv_b.reshape(cout, 1)          # (Cout, 1)

    # ---- pass 2: relu(x + noise) -> folded 1x1 conv, lane-dense output ----
    out = pl.pallas_call(
        _apply_kernel,
        out_shape=jax.ShapeDtypeStruct((n, cout, hw), jnp.float32),
        grid=grid,
        in_specs=[
            pl.BlockSpec((1, cin, thw), lambda i, t: (i, 0, t)),
            pl.BlockSpec((cin, thw), lambda i, t: (0, t)),
            pl.BlockSpec((cout, cin), lambda i, t: (0, 0)),
            pl.BlockSpec((cout, 1), lambda i, t: (0, 0)),
        ],
        out_specs=pl.BlockSpec((1, cout, thw), lambda i, t: (i, 0, t)),
        compiler_params=pltpu.CompilerParams(
            dimension_semantics=("parallel", "parallel"),
            vmem_limit_bytes=_VMEM_LIMIT),
    )(x, noise, w_fold, b_fold)

    return out.reshape(n, cout, h, w)


def make_params(key, in_planes, out_planes, level, h, w):
    k_noise, k_w, k_b = jax.random.split(key, 3)
    # Fixed noise, created on "first forward" in the torch module.
    u = jax.random.uniform(k_noise, (in_planes, h, w), dtype=jnp.float32)
    noise = (2.0 * u - 1.0) * level
    # BatchNorm2d default init.
    gamma = jnp.ones((in_planes,), jnp.float32)
    beta = jnp.zeros((in_planes,), jnp.float32)
    # Conv2d 1x1 default-ish init (deterministic uniform).
    fan_in = float(in_planes)
    bound = 1.0 / (fan_in ** 0.5)
    conv_w = jax.random.uniform(k_w, (out_planes, in_planes, 1, 1),
                                dtype=jnp.float32, minval=-bound, maxval=bound)
    conv_b = jax.random.uniform(k_b, (out_planes,), dtype=jnp.float32,
                                minval=-bound, maxval=bound)
    return noise, gamma, beta, conv_w, conv_b


if __name__ == "__main__":
    key = jax.random.PRNGKey(0)
    N, Cin, Cout, H, W = 2, 4, 8, 16, 16
    level = 0.1

    k_x, k_p = jax.random.split(key)
    x = jax.random.normal(k_x, (N, Cin, H, W), dtype=jnp.float32)
    noise, gamma, beta, conv_w, conv_b = make_params(k_p, Cin, Cout, level, H, W)

    out = noise_layer_forward(x, noise, gamma, beta, conv_w, conv_b)
    out = jax.block_until_ready(out)

    # Pure-JAX reference of the same semantics (ReLU -> BN(train) -> conv1x1).
    y = x + noise[None]
    z = jnp.maximum(y, 0.0)
    mean = jnp.mean(z, axis=(0, 2, 3), keepdims=True)
    var = jnp.mean((z - mean) ** 2, axis=(0, 2, 3), keepdims=True)
    zn = (z - mean) * lax.rsqrt(var + EPS) * gamma[None, :, None, None] \
         + beta[None, :, None, None]
    ref = jnp.einsum('nchw,oc->nohw', zn, conv_w.reshape(Cout, Cin)) \
          + conv_b[None, :, None, None]

    assert out.shape == (N, Cout, H, W)
    assert jnp.allclose(out, ref, atol=5e-4, rtol=5e-4)

    print("KERNEL_OK")
</pallas_src>

<mosaic_0001>
module attributes {stable_mosaic.version = 11 : i64} {
  func.func @_stats_kernel(%arg0: i32, %arg1: i32, %arg2: memref<1x4x256xf32, #tpu.memory_space<vmem>>, %arg3: memref<4x256xf32, #tpu.memory_space<vmem>>, %arg4: memref<4x1xf32, #tpu.memory_space<vmem>>, %arg5: memref<4x1xf32, #tpu.memory_space<vmem>>) attributes {dimension_semantics = [#tpu.dimension_semantics<arbitrary>, #tpu.dimension_semantics<arbitrary>], iteration_bounds = array<i64: 2, 1>, scalar_prefetch = 0 : i64, scratch_operands = 0 : i64, tpu.core_type = #tpu.core_type<tc>, window_params = [{transform_indices = @transform_0, window_bounds = array<i64: 1, 4, 256>}, {transform_indices = @transform_1, window_bounds = array<i64: 4, 256>}, {pipeline_mode = #tpu.pipeline_mode<synchronous>, transform_indices = @transform_2, window_bounds = array<i64: 4, 1>}, {pipeline_mode = #tpu.pipeline_mode<synchronous>, transform_indices = @transform_3, window_bounds = array<i64: 4, 1>}]} {
    %c0_i32 = arith.constant 0 : i32
    %0 = arith.cmpi eq, %arg0, %c0_i32 : i32
    %c0_i32_0 = arith.constant 0 : i32
    %1 = arith.cmpi eq, %arg1, %c0_i32_0 : i32
    %2 = arith.andi %0, %1 : i1
    %3 = arith.extui %2 : i1 to i32
    %c0_i32_1 = arith.constant 0 : i32
    %4 = arith.cmpi ne, %3, %c0_i32_1 : i32
    scf.if %4 {
      %cst_16 = arith.constant 0.000000e+00 : f32
      %22 = vector.broadcast %cst_16 : f32 to vector<4x1xf32>
      %c0_17 = arith.constant 0 : index
      %c0_18 = arith.constant 0 : index
      %23 = vector.load %arg4[%c0_17, %c0_18] : memref<4x1xf32, #tpu.memory_space<vmem>>, vector<4x1xf32>
      tpu.vector_store %arg4[%c0_17, %c0_18], %22 {strides = array<i32>} : memref<4x1xf32, #tpu.memory_space<vmem>>, vector<4x1xf32>,
      %cst_19 = arith.constant 0.000000e+00 : f32
      %24 = vector.broadcast %cst_19 : f32 to vector<4x1xf32>
      %c0_20 = arith.constant 0 : index
      %c0_21 = arith.constant 0 : index
      %25 = vector.load %arg5[%c0_20, %c0_21] : memref<4x1xf32, #tpu.memory_space<vmem>>, vector<4x1xf32>
      tpu.vector_store %arg5[%c0_20, %c0_21], %24 {strides = array<i32>} : memref<4x1xf32, #tpu.memory_space<vmem>>, vector<4x1xf32>,
    } else {
    }
    %c0 = arith.constant 0 : index
    %c0_2 = arith.constant 0 : index
    %c0_3 = arith.constant 0 : index
    %5 = vector.load %arg2[%c0, %c0_2, %c0_3] : memref<1x4x256xf32, #tpu.memory_space<vmem>>, vector<1x4x256xf32>
    %6 = vector.shape_cast %5 : vector<1x4x256xf32> to vector<4x256xf32>
    %c0_4 = arith.constant 0 : index
    %c0_5 = arith.constant 0 : index
    %7 = vector.load %arg3[%c0_4, %c0_5] : memref<4x256xf32, #tpu.memory_space<vmem>>, vector<4x256xf32>
    %8 = arith.addf %6, %7 : vector<4x256xf32>
    %cst = arith.constant 0.000000e+00 : f32
    %9 = vector.broadcast %cst : f32 to vector<4x256xf32>
    %10 = arith.maximumf %8, %9 : vector<4x256xf32>
    %c0_6 = arith.constant 0 : index
    %c0_7 = arith.constant 0 : index
    %11 = vector.load %arg4[%c0_6, %c0_7] : memref<4x1xf32, #tpu.memory_space<vmem>>, vector<4x1xf32>
    %cst_8 = arith.constant dense<0.000000e+00> : vector<4xf32>
    %12 = vector.multi_reduction <add>, %10, %cst_8 [1] : vector<4x256xf32> to vector<4xf32>
    %13 = vector.shape_cast %12 : vector<4xf32> to vector<4x1xf32>
    %14 = arith.addf %11, %13 : vector<4x1xf32>
    %c0_9 = arith.constant 0 : index
    %c0_10 = arith.constant 0 : index
    %15 = vector.load %arg4[%c0_9, %c0_10] : memref<4x1xf32, #tpu.memory_space<vmem>>, vector<4x1xf32>
    tpu.vector_store %arg4[%c0_9, %c0_10], %14 {strides = array<i32>} : memref<4x1xf32, #tpu.memory_space<vmem>>, vector<4x1xf32>,
    %c0_11 = arith.constant 0 : index
    %c0_12 = arith.constant 0 : index
    %16 = vector.load %arg5[%c0_11, %c0_12] : memref<4x1xf32, #tpu.memory_space<vmem>>, vector<4x1xf32>
    %17 = arith.mulf %10, %10 : vector<4x256xf32>
    %cst_13 = arith.constant dense<0.000000e+00> : vector<4xf32>
    %18 = vector.multi_reduction <add>, %17, %cst_13 [1] : vector<4x256xf32> to vector<4xf32>
    %19 = vector.shape_cast %18 : vector<4xf32> to vector<4x1xf32>
    %20 = arith.addf %16, %19 : vector<4x1xf32>
    %c0_14 = arith.constant 0 : index
    %c0_15 = arith.constant 0 : index
    %21 = vector.load %arg5[%c0_14, %c0_15] : memref<4x1xf32, #tpu.memory_space<vmem>>, vector<4x1xf32>
    tpu.vector_store %arg5[%c0_14, %c0_15], %20 {strides = array<i32>} : memref<4x1xf32, #tpu.memory_space<vmem>>, vector<4x1xf32>,
    return
  }
  func.func @transform_0(%arg0: i32, %arg1: i32) -> (i32, i32, i32) {
    %c0_i32 = arith.constant 0 : i32
    %c0_i32_0 = arith.constant 0 : i32
    return %arg0, %c0_i32, %arg1 : i32, i32, i32
  }
  func.func @transform_1(%arg0: i32, %arg1: i32) -> (i32, i32) {
    %c0_i32 = arith.constant 0 : i32
    %c0_i32_0 = arith.constant 0 : i32
    return %c0_i32, %arg1 : i32, i32
  }
  func.func @transform_2(%arg0: i32, %arg1: i32) -> (i32, i32) {
    %c0_i32 = arith.constant 0 : i32
    %c0_i32_0 = arith.constant 0 : i32
    %c0_i32_1 = arith.constant 0 : i32
    return %c0_i32, %c0_i32_0 : i32, i32
  }
  func.func @transform_3(%arg0: i32, %arg1: i32) -> (i32, i32) {
    %c0_i32 = arith.constant 0 : i32
    %c0_i32_0 = arith.constant 0 : i32
    %c0_i32_1 = arith.constant 0 : i32
    return %c0_i32, %c0_i32_0 : i32, i32
  }
}

</mosaic_0001>

<llo_original>
// kernel: tpu_custom_call.1
$region0: #{tpu_custom_call.1}
  #allocation0 [shape = 'u32[]', space=smem, size = 0x4, offset = 0x4, fixed_abs, tag = 'smem constant byte address 0x4 - core index']
  #allocation1 [shape = 'u32[144,128]{1,0:T(1,128)}', space=vmem, size = 0x12000, scoped, tag = 'internal scratch']
  %s0 = inlined_call_operand.hbm [shape: f32[2,4,256], index: 0, kind: input, shape index: {}]
  %s1 = inlined_call_operand.hbm [shape: f32[4,256], index: 1, kind: input, shape index: {}]
  %s2 = inlined_call_operand.hbm [shape: f32[4,1], index: 2, kind: output, shape index: {0}]
  %s3 = inlined_call_operand.hbm [shape: f32[4,1], index: 3, kind: output, shape index: {1}]
  %4 = xla_tuple %s2, %s3
  %s5 = sld [smem:[#allocation0]]
  $region61: #{tpu_custom_call.1} parent=0
    _
  %s7 = ssub.s32 1, %s5
  %s8 = scalar_select 0, %s7, %s5
  $region1: #{tpu_custom_call.1} parent=0
    #allocation2 [shape = 'u8[8192]{0}', space=vmem, size = 0x2000, scoped, tag = 'input window, operand 0']
    #allocation3 [shape = 's32[2]{0}', space=sflag, size = 0x8, scoped, tag = 'scoped memory for tpu_custom_call.1']
    #allocation4 [shape = 's32[2]{0}', space=sflag, size = 0x8, scoped, tag = 'scoped memory for tpu_custom_call.1']
    #allocation5 [shape = 'u8[4096]{0}', space=vmem, size = 0x1000, scoped, tag = 'input window, operand 1, single buffered']
    #allocation6 [shape = 's32[1]{0}', space=sflag, size = 0x4, scoped, tag = 'scoped memory for tpu_custom_call.1']
    #allocation7 [shape = 'u8[2048]{0}', space=vmem, size = 0x800, scoped, tag = 'output window, operand 0, single buffered']
    #allocation8 [shape = 'u8[2048]{0}', space=vmem, size = 0x800, scoped, tag = 'output window, operand 1, single buffered']
    #allocation9 [shape = 's32[1]{0}', space=sflag, size = 0x4, scoped, tag = 'scoped memory for tpu_custom_call.1']
    %9 = vsyncpa [#allocation3], 0
    %s10 = scalar_lea.sflag [#allocation3], 1
    %11 = vsyncpa %s10, 0
    %12 = vsyncpa [#allocation6], 0
    %13 = vsyncpa [#allocation4], 0
    %14 = vsyncpa [#allocation9], 0
    loop: start=0, step=1, limit=4
    $region2: #{tpu_custom_call.1} parent=1 // loop_pre_header
      _
    $region3: #{tpu_custom_call.1} parent=1 // loop_header
      %s16 = sphi 0, %s20
      %p17 = scmp.ge.s32.totalorder %s16, 4
      %s23 = sphi 0, %s35
      %s24 = sphi 0, %s31
      %s25 = sphi 0, %s23
      %s26 = sphi 0, %s24
      %s27 = sphi 0, %s25
      %s28 = sphi 0, %s26
      %s40 = sphi 0, %s42
      %s43 = sphi 0, %s40
      %s44 = sphi 0, %s43
      %s60 = sphi 0, %s44
      %s66 = sphi 0, %s68
      %s69 = sphi 0, %s66
      %s70 = sphi 0, %s69
      %s86 = sphi 0, %s70
      %s90 = sphi 0, %s90
      %s92 = sphi 0, %s90
      %s93 = sphi 0, %s92
      %s107 = sphi 0, %s93
      %s111 = sphi 0, %s111
      %s113 = sphi 0, %s111
      %s114 = sphi 0, %s113
      %s128 = sphi 0, %s114
    $region4: #{tpu_custom_call.1} parent=1 // loop_header_branch
      %19 = sbr.rel (%p17) target = $region8
    $region5: #{tpu_custom_call.1} parent=1 // loop_body
      %s21 = ssub.s32 %s16, 1
      %s22 = ssub.s32 %s16, 2
      %s29 = sadd.s32 1, %s24
      %p30 = scmp.ge.s32.totalorder %s29, 1
      %s31 = scalar_select %p30, 0, %s29
      %s32 = sadd.s32 1, %s23
      %s33 = scalar_select %p30, %s32, %s23
      %p34 = scmp.ge.s32.totalorder %s33, 2
      %s35 = scalar_select %p34, 0, %s33
      %s36 = ssub.s32 %s23, %s35
      %s37 = ssub.s32 %s24, %s31
      %s38 = sor.u32 %s36, %s37
      %p39 = scmp.eq.s32.totalorder %s38, 0
      %s41 = sadd.s32 %s40, 1
      %s42 = scalar_select %p39, %s40, %s41
      %p45 = pneg %p39
      %p46 = scmp.eq.s32.totalorder %s16, 1
      %p47 = por %p45, %p46
      %p48 = scmp.ne.s32.totalorder %s40, %s43
      %p49 = scmp.eq.s32.totalorder %s16, 0
      %p50 = por %p48, %p49
      %p51 = scmp.ne.s32.totalorder %s40, %s43
      %p52 = scmp.eq.s32.totalorder %s21, 1
      %p53 = por %p51, %p52
      %p54 = scmp.ne.s32.totalorder %s43, %s44
      %p55 = scmp.eq.s32.totalorder %s21, 0
      %p56 = por %p54, %p55
      %p57 = scmp.ne.s32.totalorder %s43, %s44
      %p58 = scmp.eq.s32.totalorder %s22, 1
      %p59 = por %p57, %p58
      %p61 = scmp.ne.s32.totalorder %s44, %s60
      %p62 = scmp.eq.s32.totalorder %s22, 0
      %p63 = por %p61, %p62
      %s64 = ssub.s32 %s24, %s31
      %p65 = scmp.eq.s32.totalorder %s64, 0
      %s67 = sadd.s32 %s66, 1
      %s68 = scalar_select %p65, %s66, %s67
      %p71 = pneg %p65
      %p72 = scmp.eq.s32.totalorder %s16, 1
      %p73 = por %p71, %p72
      %p74 = scmp.ne.s32.totalorder %s66, %s69
      %p75 = scmp.eq.s32.totalorder %s16, 0
      %p76 = por %p74, %p75
      %p77 = scmp.ne.s32.totalorder %s66, %s69
      %p78 = scmp.eq.s32.totalorder %s21, 1
      %p79 = por %p77, %p78
      %p80 = scmp.ne.s32.totalorder %s69, %s70
      %p81 = scmp.eq.s32.totalorder %s21, 0
      %p82 = por %p80, %p81
      %p83 = scmp.ne.s32.totalorder %s69, %s70
      %p84 = scmp.eq.s32.totalorder %s22, 1
      %p85 = por %p83, %p84
      %p87 = scmp.ne.s32.totalorder %s70, %s86
      %p88 = scmp.eq.s32.totalorder %s22, 0
      %p89 = por %p87, %p88
      %s91 = sadd.s32 %s90, 1
      %p94 = scmp.eq.s32.totalorder %s16, 1
      %p95 = scmp.ne.s32.totalorder %s90, %s92
      %p96 = scmp.eq.s32.totalorder %s16, 0
      %p97 = por %p95, %p96
      %p98 = scmp.ne.s32.totalorder %s90, %s92
      %p99 = scmp.eq.s32.totalorder %s21, 1
      %p100 = por %p98, %p99
      %p101 = scmp.ne.s32.totalorder %s92, %s93
      %p102 = scmp.eq.s32.totalorder %s21, 0
      %p103 = por %p101, %p102
      %p104 = scmp.ne.s32.totalorder %s92, %s93
      %p105 = scmp.eq.s32.totalorder %s22, 1
      %p106 = por %p104, %p105
      %p108 = scmp.ne.s32.totalorder %s93, %s107
      %p109 = scmp.eq.s32.totalorder %s22, 0
      %p110 = por %p108, %p109
      %s112 = sadd.s32 %s111, 1
      %p115 = scmp.eq.s32.totalorder %s16, 1
      %p116 = scmp.ne.s32.totalorder %s111, %s113
      %p117 = scmp.eq.s32.totalorder %s16, 0
      %p118 = por %p116, %p117
      %p119 = scmp.ne.s32.totalorder %s111, %s113
      %p120 = scmp.eq.s32.totalorder %s21, 1
      %p121 = por %p119, %p120
      %p122 = scmp.ne.s32.totalorder %s113, %s114
      %p123 = scmp.eq.s32.totalorder %s21, 0
      %p124 = por %p122, %p123
      %p125 = scmp.ne.s32.totalorder %s113, %s114
      %p126 = scmp.eq.s32.totalorder %s22, 1
      %p127 = por %p125, %p126
      %p129 = scmp.ne.s32.totalorder %s114, %s128
      %p130 = scmp.eq.s32.totalorder %s22, 0
      %p131 = por %p129, %p130
      %p132 = scmp.le.s32.totalorder 1, %s16
      %p133 = scmp.lt.s32.totalorder %s16, 3
      %p134 = pnand %p132, %p133
      %p135 = pneg %p134
      // Predicated region
      $region9: #{tpu_custom_call.1} parent=5 // pred_check
        _
      $region10: #{tpu_custom_call.1} parent=5 // pred_check_branch
        %137 = sbr.rel (%p134) target = $region12
      $region11: #{tpu_custom_call.1} parent=5 // pred_region
        %s138 = ssub.s32 %s16, 1
        // Predicated region
        $region13: #{tpu_custom_call.1} parent=11 // pred_check
          %p139 = pneg %p82
        $region14: #{tpu_custom_call.1} parent=11 // pred_check_branch
          %141 = sbr.rel (%p139) target = $region16
        $region15: #{tpu_custom_call.1} parent=11 // pred_region
          %s142 = smul.u32 2, %s26
          %s144 = ssub.s32 128, 128
          %145 = vsyncadd [#allocation6], %s144
          %s146 = smul.addr %s142, 64
          %s147 = scalar_lea.hbm %s1, %s146
          %s149 = sshll.u32 [#allocation5], 4
          %s150 = int_to_ptr.vmem [resolvable:$true] %s149
          %152 = dma.hbm_to_vmem [thread:$0]  %s147, 128, %s150, [#allocation6]
        $region16: #{tpu_custom_call.1} parent=11 // pred_fallthru
          _
      $region12: #{tpu_custom_call.1} parent=5 // pred_fallthru
        _
      %p153 = scmp.lt.s32.totalorder %s16, 2
      // Predicated region
      $region17: #{tpu_custom_call.1} parent=5 // pred_check
        %p154 = pneg %p153
      $region18: #{tpu_custom_call.1} parent=5 // pred_check_branch
        %156 = sbr.rel (%p154) target = $region20
      $region19: #{tpu_custom_call.1} parent=5 // pred_region
        // Predicated region
        $region21: #{tpu_custom_call.1} parent=19 // pred_check
          %p157 = pneg %p50
        $region22: #{tpu_custom_call.1} parent=19 // pred_check_branch
          %159 = sbr.rel (%p157) target = $region24
        $region23: #{tpu_custom_call.1} parent=19 // pred_region
          %s160 = sand.u32 %s40, 1
          %s161 = scalar_lea.sflag [#allocation3], %s160
          %s162 = sand.u32 %s40, 1
          %s163 = smul.addr %s162, 8
          %s164 = scalar_lea.vmem [#allocation2], %s163
          %s165 = smul.u32 2, %s24
          %s167 = ssub.s32 128, 128
          %168 = vsyncadd %s161, %s167
          %s169 = smul.addr %s23, 2
          %s170 = sadd.s32 %s165, %s169
          %s171 = smul.addr %s170, 64
          %s172 = scalar_lea.hbm %s0, %s171
          %s174 = sshll.u32 %s164, 4
          %s175 = int_to_ptr.vmem [resolvable:$true] %s174
          %177 = dma.hbm_to_vmem [thread:$0]  %s172, 128, %s175, %s161
        $region24: #{tpu_custom_call.1} parent=19 // pred_fallthru
          _
      $region20: #{tpu_custom_call.1} parent=5 // pred_fallthru
        _
      %p178 = scmp.le.s32.totalorder 1, %s16
      %p179 = scmp.lt.s32.totalorder %s16, 3
      %p180 = pnand %p178, %p179
      %p181 = pneg %p180
      // Predicated region
      $region25: #{tpu_custom_call.1} parent=5 // pred_check
        _
      $region26: #{tpu_custom_call.1} parent=5 // pred_check_branch
        %183 = sbr.rel (%p180) target = $region28
      $region27: #{tpu_custom_call.1} parent=5 // pred_region
        %s184 = ssub.s32 %s16, 1
        %s185 = sand.u32 %s43, 1
        %s186 = scalar_lea.sflag [#allocation3], %s185
        %s187 = sand.u32 %s43, 1
        %s188 = smul.addr %s187, 8
        %s189 = scalar_lea.vmem [#allocation2], %s188
        // Predicated region
        $region29: #{tpu_custom_call.1} parent=27 // pred_check
          %p190 = pneg %p56
        $region30: #{tpu_custom_call.1} parent=27 // pred_check_branch
          %192 = sbr.rel (%p190) target = $region32
        $region31: #{tpu_custom_call.1} parent=27 // pred_region
          %193 = dma.done %s186, 128
        $region32: #{tpu_custom_call.1} parent=27 // pred_fallthru
          _
        // Predicated region
        $region33: #{tpu_custom_call.1} parent=27 // pred_check
          %p194 = pneg %p82
        $region34: #{tpu_custom_call.1} parent=27 // pred_check_branch
          %196 = sbr.rel (%p194) target = $region36
        $region35: #{tpu_custom_call.1} parent=27 // pred_region
          %197 = dma.done [#allocation6], 128
        $region36: #{tpu_custom_call.1} parent=27 // pred_fallthru
          _
        %s198 = sand.u32 %s43, 1
        %s199 = scalar_lea.sflag [#allocation3], %s198
        %s200 = sand.u32 %s43, 1
        %s201 = smul.addr %s200, 8
        %s202 = scalar_lea.vmem [#allocation2], %s201
        %p203 = pneg %p56
        %p204 = pneg %p53
        %p205 = pneg %p82
        %p206 = pneg %p79
        %p207 = pneg %p103
        %p208 = pneg %p100
        %p209 = pneg %p124
        %p210 = pneg %p121
        %s211 = smul.u32 2, %s26
        %s212 = smul.u32 2, %s26
        %p213 = scmp.eq.s32.totalorder %s25, 0
        %p214 = scmp.eq.s32.totalorder %s26, 0
        %p215 = pnand %p213, %p214
        %p216 = pneg %p215
        // Predicated region
        $region37: #{tpu_custom_call.1} parent=27 // pred_check
          _
        $region38: #{tpu_custom_call.1} parent=27 // pred_check_branch
          %218 = sbr.rel (%p215) target = $region40
        $region39: #{tpu_custom_call.1} parent=27 // pred_region
          %vm219 = vcmask 3072
          %220 = vst.msk [vmem:[#allocation7] sm:$0xf] %vm219, 0.0
          %221 = vst.msk [vmem:[#allocation8] sm:$0xf] %vm219, 0.0
        $region40: #{tpu_custom_call.1} parent=27 // pred_fallthru
          _
        %v222 = vld [vmem:[%s189] sm:$0xff]
        %v223 = vld [vmem:[#allocation5] sm:$0xff]
        %v224 = vadd.f32 %v222, %v223
        %v225 = vmax.f32 %v224, 0.0
        %v226 = vld [vmem:[#allocation7] sm:$0xf]
        %v228 = vcombine.high %v225, %v225
        %vm230 = vcmask 1043456
        %v231 = vsel %vm230, %v225, 0.0
        %v232 = vsel %vm230, %v228, 0.0
        %v233 = vadd.f32 %v231, %v232
        %234 = vadd.xlane.f32.xlu0 %v233
        %v235 = vpop.xlane.xlu0 %234
        %v236 = vadd.f32 %v226, %v235
        %vm237 = vcmask 3072
        %238 = vst.msk [vmem:[#allocation7] sm:$0xf] %vm237, %v236
        %v239 = vld [vmem:[#allocation8] sm:$0xf]
        %v240 = vmul.f32 %v225, %v225
        %v242 = vcombine.high %v240, %v240
        %v244 = vsel %vm230, %v240, 0.0
        %v245 = vsel %vm230, %v242, 0.0
        %v246 = vadd.f32 %v244, %v245
        %247 = vadd.xlane.f32.xlu0 %v246
        %v248 = vpop.xlane.xlu0 %247
        %v249 = vadd.f32 %v239, %v248
        %250 = vst.msk [vmem:[#allocation8] sm:$0xf] %vm237, %v249
        // Predicated region
        $region41: #{tpu_custom_call.1} parent=27 // pred_check
          %p251 = pneg %p100
        $region42: #{tpu_custom_call.1} parent=27 // pred_check_branch
          %253 = sbr.rel (%p251) target = $region44
        $region43: #{tpu_custom_call.1} parent=27 // pred_region
          %s255 = ssub.s32 64, 64
          %256 = vsyncadd [#allocation4], %s255
          %s258 = sshll.u32 [#allocation7], 4
          %s259 = int_to_ptr.vmem [resolvable:$true] %s258
          %261 = dma.vmem_to_hbm [thread:$0]  %s259, 64, %s2, [#allocation4]
        $region44: #{tpu_custom_call.1} parent=27 // pred_fallthru
          _
        // Predicated region
        $region45: #{tpu_custom_call.1} parent=27 // pred_check
          %p262 = pneg %p121
        $region46: #{tpu_custom_call.1} parent=27 // pred_check_branch
          %264 = sbr.rel (%p262) target = $region48
        $region47: #{tpu_custom_call.1} parent=27 // pred_region
          %s266 = ssub.s32 64, 64
          %267 = vsyncadd [#allocation9], %s266
          %s269 = sshll.u32 [#allocation8], 4
          %s270 = int_to_ptr.vmem [resolvable:$true] %s269
          %272 = dma.vmem_to_hbm [thread:$0]  %s270, 64, %s3, [#allocation9]
        $region48: #{tpu_custom_call.1} parent=27 // pred_fallthru
          _
        // Predicated region
        $region49: #{tpu_custom_call.1} parent=27 // pred_check
          %p273 = pneg %p100
        $region50: #{tpu_custom_call.1} parent=27 // pred_check_branch
          %275 = sbr.rel (%p273) target = $region52
        $region51: #{tpu_custom_call.1} parent=27 // pred_region
          %276 = dma.done [#allocation4], 64
        $region52: #{tpu_custom_call.1} parent=27 // pred_fallthru
          _
        // Predicated region
        $region53: #{tpu_custom_call.1} parent=27 // pred_check
          %p277 = pneg %p121
        $region54: #{tpu_custom_call.1} parent=27 // pred_check_branch
          %279 = sbr.rel (%p277) target = $region56
        $region55: #{tpu_custom_call.1} parent=27 // pred_region
          %280 = dma.done [#allocation9], 64
        $region56: #{tpu_custom_call.1} parent=27 // pred_fallthru
          _
      $region28: #{tpu_custom_call.1} parent=5 // pred_fallthru
        _
      %p281 = scmp.le.s32.totalorder 2, %s16
      // Predicated region
      $region57: #{tpu_custom_call.1} parent=5 // pred_check
        %p282 = pneg %p281
      $region58: #{tpu_custom_call.1} parent=5 // pred_check_branch
        %284 = sbr.rel (%p282) target = $region60
      $region59: #{tpu_custom_call.1} parent=5 // pred_region
        %s285 = ssub.s32 %s16, 2
      $region60: #{tpu_custom_call.1} parent=5 // pred_fallthru
        _
    $region6: #{tpu_custom_call.1} parent=1 // loop_footer
      %s20 = sadd.s32 1, %s16
    $region7: #{tpu_custom_call.1} parent=1 // loop_footer_branch
      %15 = sbr.rel target = $region3
    $region8: #{tpu_custom_call.1} parent=1 // loop_exit
      _
    %286 = vsyncpa [#allocation3], 1
    %s287 = scalar_lea.sflag [#allocation3], 1
    %288 = vsyncpa %s287, 1
    %289 = vsyncpa [#allocation6], 1
    %290 = vsyncpa [#allocation4], 1
    %s291 = scalar_lea.sflag [#allocation4], 1
    %292 = vsyncpa %s291, 1
    %293 = vsyncpa [#allocation9], 1

</llo_original>
